<compile_context>
chip_gen: v7x
topology: tpu7x:2x2x1
jax: 0.10.0
libtpu: 0.0.40
codegen_flags: <defaults>
</compile_context>

<pallas_src>
import functools

import jax
import jax.numpy as jnp
from jax.experimental import pallas as pl
from jax.experimental.pallas import tpu as pltpu

LANE = 128
SUBLANE = 8
ACC_ROWS_MAX = 64          # 8 f32 vregs per core -> 8 independent accumulation chains
MAX_BLOCK_ROWS = 8192      # 8192 * 128 * 4 B = 4 MiB f32 per input per block
NUM_CORES = 2              # leading "parallel" grid axis (v7x megacore); no-op on 1-TC chips
VMEM_LIMIT_BYTES = 32 * 1024 * 1024


def _elementwise_loss(d, losstype):
    """Per-element loss on the (already f32) difference d = x - target."""
    if losstype == "l2":
        return d * d
    if losstype == "l1":
        return jnp.abs(d)
    if losstype == "l1_smooth":
        ad = jnp.abs(d)
        return jnp.where(ad < 1.0, 0.5 * d * d, ad - 0.5)
    if losstype == "l_log":
        return -jnp.log(1.0 - jnp.abs(d) + 1e-6)
    raise ValueError("reconstruction loss type error!")


def _loss_kernel(x_ref, t_ref, o_ref, *, losstype, acc_rows):
    """Accumulate a per-core resident (acc_rows, 128) partial-sum slab."""
    # Zero this core's accumulator slab on its first reduction step.
    @pl.when(pl.program_id(1) == 0)
    def _():
        o_ref[...] = jnp.zeros_like(o_ref)

    # Native-dtype loads (halves DMA bytes for bf16 inputs); f32 math on VPU.
    d = x_ref[...].astype(jnp.float32) - t_ref[...].astype(jnp.float32)
    v = _elementwise_loss(d, losstype)

    # Layout-preserving reshape (block_rows, 128) -> (groups, acc_rows, 128);
    # the axis-0 sum is acc_rows/8 independent VALU vreg-add chains.  The
    # cross-lane reduce is deferred to the wrapper (one tiny XLA op).
    block_rows = v.shape[0]
    o_ref[...] += jnp.sum(v.reshape(block_rows // acc_rows, acc_rows, LANE), axis=0)


def _tile_params(rows, max_block_rows):
    """Pick (acc_rows, block_rows, cores, blocks_per_core) for a given row count."""
    if rows < SUBLANE:
        return None
    acc_rows = min(ACC_ROWS_MAX,
                   (rows // SUBLANE) * SUBLANE,
                   (max_block_rows // SUBLANE) * SUBLANE)
    acc_rows = max(acc_rows, SUBLANE)
    block_rows = min(max_block_rows, rows)
    block_rows = (block_rows // acc_rows) * acc_rows
    if block_rows == 0:
        return None
    num_blocks = rows // block_rows
    cores = NUM_CORES if num_blocks >= NUM_CORES else 1
    blocks_per_core = num_blocks // cores
    return acc_rows, block_rows, cores, blocks_per_core


def reconstruction_loss(x, target, losstype="l2", eps=1e-3,
                        max_block_rows=MAX_BLOCK_ROWS):
    """Pallas equivalent of ReconstructionLoss(losstype).forward(x, target)."""
    # NOTE: `eps` is unused, matching the PyTorch module (l_log hardcodes 1e-6).
    assert x.shape == target.shape
    n = int(x.size)

    xf = jnp.ravel(x)          # free reshape, no copy, native dtype
    tf = jnp.ravel(target)
    rows = n // LANE
    n_main = rows * LANE

    total = jnp.float32(0.0)
    rows_kernel = 0

    params = _tile_params(rows, max_block_rows)
    if params is not None:
        acc_rows, block_rows, cores, blocks_per_core = params
        rows_kernel = cores * blocks_per_core * block_rows

        # No jnp.pad: for ragged numel, only slice off the 128-aligned prefix
        # (free when numel % 128 == 0, which is the common NCHW case).
        x_main = xf if n_main == n else xf[:n_main]
        t_main = tf if n_main == n else tf[:n_main]
        x2 = x_main.reshape(rows, LANE)
        t2 = t_main.reshape(rows, LANE)

        kernel = functools.partial(_loss_kernel, losstype=losstype,
                                   acc_rows=acc_rows)
        acc = pl.pallas_call(
            kernel,
            out_shape=jax.ShapeDtypeStruct((cores * acc_rows, LANE), jnp.float32),
            grid=(cores, blocks_per_core),
            in_specs=[
                pl.BlockSpec((block_rows, LANE),
                             lambda c, i: (c * blocks_per_core + i, 0)),
                pl.BlockSpec((block_rows, LANE),
                             lambda c, i: (c * blocks_per_core + i, 0)),
            ],
            out_specs=pl.BlockSpec((acc_rows, LANE), lambda c, i: (c, 0)),
            compiler_params=pltpu.CompilerParams(
                dimension_semantics=("parallel", "arbitrary"),
                vmem_limit_bytes=VMEM_LIMIT_BYTES,
            ),
        )(x2, t2)
        total = jnp.sum(acc)

    # Remainder (ragged rows past the last full block + <128-lane tail) is
    # computed in plain JAX -- negligible bytes, no padding, no correction.
    if rows_kernel * LANE < n:
        dt = (xf[rows_kernel * LANE:].astype(jnp.float32)
              - tf[rows_kernel * LANE:].astype(jnp.float32))
        total = total + jnp.sum(_elementwise_loss(dt, losstype))

    return total / jnp.float32(n)


def _reference(x, target, losstype):
    d = x.astype(jnp.float32) - target.astype(jnp.float32)
    if losstype == "l2":
        return jnp.mean(d * d)
    if losstype == "l1":
        return jnp.mean(jnp.abs(d))
    if losstype == "l1_smooth":
        ad = jnp.abs(d)
        return jnp.mean(jnp.where(ad < 1.0, 0.5 * d * d, ad - 0.5))
    if losstype == "l_log":
        return jnp.mean(jnp.mean(-jnp.log(1.0 - jnp.abs(d) + 1e-6),
                                 axis=(1, 2, 3)))
    raise ValueError


if __name__ == "__main__":
    key = jax.random.PRNGKey(0)
    k1, k2, k3, k4, k5, k6 = jax.random.split(key, 6)

    # (shape, key_x, key_t, max_block_rows override)
    cases = [
        ((2, 4, 16, 16), k1, k2, MAX_BLOCK_ROWS),  # aligned fast path, 1 block
        ((2, 3, 17, 17), k3, k4, MAX_BLOCK_ROWS),  # ragged: aligned prefix + JAX tail
        ((2, 4, 64, 64), k5, k6, 64),              # small blocks -> 2-core, multi-block path
    ]

    ok = True
    for shape, ka, kb, mbr in cases:
        x = jax.random.uniform(ka, shape, dtype=jnp.float32)
        target = jax.random.uniform(kb, shape, dtype=jnp.float32)
        for losstype in ("l2", "l1", "l1_smooth", "l_log"):
            got = jax.block_until_ready(
                reconstruction_loss(x, target, losstype, max_block_rows=mbr))
            want = _reference(x, target, losstype)
            if not jnp.allclose(got, want, rtol=2e-5, atol=1e-6):
                ok = False
                print(f"MISMATCH {shape} {losstype}: got={got}, want={want}")

    if ok:
        print("KERNEL_OK")
</pallas_src>

<mosaic_0001>
module attributes {stable_mosaic.version = 11 : i64} {
  func.func @_loss_kernel(%arg0: i32, %arg1: i32, %arg2: memref<16x128xf32, #tpu.memory_space<vmem>>, %arg3: memref<16x128xf32, #tpu.memory_space<vmem>>, %arg4: memref<16x128xf32, #tpu.memory_space<vmem>>) attributes {dimension_semantics = [#tpu.dimension_semantics<parallel>, #tpu.dimension_semantics<arbitrary>], iteration_bounds = array<i64: 1, 1>, scalar_prefetch = 0 : i64, scratch_operands = 0 : i64, tpu.core_type = #tpu.core_type<tc>, window_params = [{transform_indices = @transform_0, window_bounds = array<i64: 16, 128>}, {transform_indices = @transform_1, window_bounds = array<i64: 16, 128>}, {transform_indices = @transform_2, window_bounds = array<i64: 16, 128>}]} {
    %c0_i32 = arith.constant 0 : i32
    %0 = arith.cmpi eq, %arg1, %c0_i32 : i32
    %1 = arith.extui %0 : i1 to i32
    %c0_i32_0 = arith.constant 0 : i32
    %2 = arith.cmpi ne, %1, %c0_i32_0 : i32
    scf.if %2 {
      %cst_8 = arith.constant 0.000000e+00 : f32
      %12 = vector.broadcast %cst_8 : f32 to vector<16x128xf32>
      %c0_9 = arith.constant 0 : index
      %c0_10 = arith.constant 0 : index
      %13 = vector.load %arg4[%c0_9, %c0_10] : memref<16x128xf32, #tpu.memory_space<vmem>>, vector<16x128xf32>
      tpu.vector_store %arg4[%c0_9, %c0_10], %12 {strides = array<i32>} : memref<16x128xf32, #tpu.memory_space<vmem>>, vector<16x128xf32>,
    } else {
    }
    %c0 = arith.constant 0 : index
    %c0_1 = arith.constant 0 : index
    %3 = vector.load %arg2[%c0, %c0_1] : memref<16x128xf32, #tpu.memory_space<vmem>>, vector<16x128xf32>
    %c0_2 = arith.constant 0 : index
    %c0_3 = arith.constant 0 : index
    %4 = vector.load %arg3[%c0_2, %c0_3] : memref<16x128xf32, #tpu.memory_space<vmem>>, vector<16x128xf32>
    %5 = arith.subf %3, %4 : vector<16x128xf32>
    %6 = arith.mulf %5, %5 : vector<16x128xf32>
    %c0_4 = arith.constant 0 : index
    %c0_5 = arith.constant 0 : index
    %7 = vector.load %arg4[%c0_4, %c0_5] : memref<16x128xf32, #tpu.memory_space<vmem>>, vector<16x128xf32>
    %8 = vector.shape_cast %6 : vector<16x128xf32> to vector<1x16x128xf32>
    %cst = arith.constant dense<0.000000e+00> : vector<16x128xf32>
    %9 = vector.multi_reduction <add>, %8, %cst [0] : vector<1x16x128xf32> to vector<16x128xf32>
    %10 = arith.addf %7, %9 : vector<16x128xf32>
    %c0_6 = arith.constant 0 : index
    %c0_7 = arith.constant 0 : index
    %11 = vector.load %arg4[%c0_6, %c0_7] : memref<16x128xf32, #tpu.memory_space<vmem>>, vector<16x128xf32>
    tpu.vector_store %arg4[%c0_6, %c0_7], %10 {strides = array<i32>} : memref<16x128xf32, #tpu.memory_space<vmem>>, vector<16x128xf32>,
    return
  }
  func.func @transform_0(%arg0: i32, %arg1: i32) -> (i32, i32) {
    %c1_i32 = arith.constant 1 : i32
    %0 = arith.muli %arg0, %c1_i32 : i32
    %1 = arith.addi %0, %arg1 : i32
    %c0_i32 = arith.constant 0 : i32
    %c0_i32_0 = arith.constant 0 : i32
    return %1, %c0_i32 : i32, i32
  }
  func.func @transform_1(%arg0: i32, %arg1: i32) -> (i32, i32) {
    %c1_i32 = arith.constant 1 : i32
    %0 = arith.muli %arg0, %c1_i32 : i32
    %1 = arith.addi %0, %arg1 : i32
    %c0_i32 = arith.constant 0 : i32
    %c0_i32_0 = arith.constant 0 : i32
    return %1, %c0_i32 : i32, i32
  }
  func.func @transform_2(%arg0: i32, %arg1: i32) -> (i32, i32) {
    %c0_i32 = arith.constant 0 : i32
    %c0_i32_0 = arith.constant 0 : i32
    return %arg0, %c0_i32 : i32, i32
  }
}

</mosaic_0001>

<llo_original>
// kernel: tpu_custom_call.1
$region0: #{tpu_custom_call.1}
  #allocation0 [shape = 'u32[]', space=smem, size = 0x4, offset = 0x4, fixed_abs, tag = 'smem constant byte address 0x4 - core index']
  #allocation1 [shape = 'u32[144,128]{1,0:T(1,128)}', space=vmem, size = 0x12000, scoped, tag = 'internal scratch']
  %s0 = inlined_call_operand.hbm [shape: f32[16,128], index: 0, kind: input, shape index: {}]
  %s1 = inlined_call_operand.hbm [shape: f32[16,128], index: 1, kind: input, shape index: {}]
  %s2 = inlined_call_operand.hbm [shape: f32[16,128], index: 2, kind: output, shape index: {}]
  %s3 = sld [smem:[#allocation0]]
  $region30: #{tpu_custom_call.1} parent=0
    _
  %s5 = ssub.s32 1, %s3
  %s6 = scalar_select 0, %s5, %s3
  $region1: #{tpu_custom_call.1} parent=0
    #allocation2 [shape = 'u8[8192]{0}', space=vmem, size = 0x2000, scoped, tag = 'input window, operand 0, single buffered']
    #allocation3 [shape = 's32[1]{0}', space=sflag, size = 0x4, scoped, tag = 'scoped memory for tpu_custom_call.1']
    #allocation4 [shape = 's32[1]{0}', space=sflag, size = 0x4, scoped, tag = 'scoped memory for tpu_custom_call.1']
    #allocation5 [shape = 'u8[8192]{0}', space=vmem, size = 0x2000, scoped, tag = 'input window, operand 1, single buffered']
    #allocation6 [shape = 's32[1]{0}', space=sflag, size = 0x4, scoped, tag = 'scoped memory for tpu_custom_call.1']
    #allocation7 [shape = 'u8[8192]{0}', space=vmem, size = 0x2000, scoped, tag = 'output window, operand 0, single buffered']
    %7 = vsyncpa [#allocation3], 0
    %8 = vsyncpa [#allocation6], 0
    %9 = vsyncpa [#allocation4], 0
    // Predicated region
    $region2: #{tpu_custom_call.1} parent=1 // pred_check
      _
    $region3: #{tpu_custom_call.1} parent=1 // pred_check_branch
      %11 = sbr.rel (0) target = $region5
    $region4: #{tpu_custom_call.1} parent=1 // pred_region
      %s12 = sadd.s32 0, 0
      %s13 = smul.u32 2, %s12
      %s15 = ssub.s32 256, 256
      %16 = vsyncadd [#allocation3], %s15
      %s17 = smul.addr %s13, 128
      %s18 = scalar_lea.hbm %s0, %s17
      %s19 = sshll.u32 [#allocation2], 4
      %s20 = int_to_ptr.vmem [resolvable:$true] %s19
      %25 = dma.hbm_to_vmem [thread:$0]  %s18, 256, %s20, [#allocation3], 128, 128, 8
    $region5: #{tpu_custom_call.1} parent=1 // pred_fallthru
      _
    // Predicated region
    $region6: #{tpu_custom_call.1} parent=1 // pred_check
      _
    $region7: #{tpu_custom_call.1} parent=1 // pred_check_branch
      %27 = sbr.rel (0) target = $region9
    $region8: #{tpu_custom_call.1} parent=1 // pred_region
      %s28 = sadd.s32 0, 0
      %s29 = smul.u32 2, %s28
      %s31 = ssub.s32 256, 256
      %32 = vsyncadd [#allocation6], %s31
      %s33 = smul.addr %s29, 128
      %s34 = scalar_lea.hbm %s1, %s33
      %s35 = sshll.u32 [#allocation5], 4
      %s36 = int_to_ptr.vmem [resolvable:$true] %s35
      %41 = dma.hbm_to_vmem [thread:$0]  %s34, 256, %s36, [#allocation6], 128, 128, 8
    $region9: #{tpu_custom_call.1} parent=1 // pred_fallthru
      _
    // Predicated region
    $region10: #{tpu_custom_call.1} parent=1 // pred_check
      _
    $region11: #{tpu_custom_call.1} parent=1 // pred_check_branch
      %43 = sbr.rel (0) target = $region13
    $region12: #{tpu_custom_call.1} parent=1 // pred_region
      %44 = dma.done [#allocation3], 256
    $region13: #{tpu_custom_call.1} parent=1 // pred_fallthru
      _
    // Predicated region
    $region14: #{tpu_custom_call.1} parent=1 // pred_check
      _
    $region15: #{tpu_custom_call.1} parent=1 // pred_check_branch
      %46 = sbr.rel (0) target = $region17
    $region16: #{tpu_custom_call.1} parent=1 // pred_region
      %47 = dma.done [#allocation6], 256
    $region17: #{tpu_custom_call.1} parent=1 // pred_fallthru
      _
    %s48 = sadd.s32 0, 0
    %s49 = smul.u32 2, %s48
    %s50 = sadd.s32 0, 0
    %s51 = smul.u32 2, %s50
    %p52 = scmp.eq.s32.totalorder 0, 0
    // Predicated region
    $region18: #{tpu_custom_call.1} parent=1 // pred_check
      %p53 = pneg %p52
    $region19: #{tpu_custom_call.1} parent=1 // pred_check_branch
      %55 = sbr.rel (%p53) target = $region21
    $region20: #{tpu_custom_call.1} parent=1 // pred_region
      %56 = vst [vmem:[#allocation7] sm:$0xff] 0.0
      %57 = vst [vmem:[#allocation7 + $0x8] sm:$0xff] 0.0
    $region21: #{tpu_custom_call.1} parent=1 // pred_fallthru
      _
    %v58 = vld [vmem:[#allocation2] sm:$0xff]
    %v59 = vld [vmem:[#allocation2 + $0x8] sm:$0xff]
    %v60 = vld [vmem:[#allocation5] sm:$0xff]
    %v61 = vld [vmem:[#allocation5 + $0x8] sm:$0xff]
    %v62 = vsub.f32 %v58, %v60
    %v63 = vsub.f32 %v59, %v61
    %v64 = vmul.f32 %v62, %v62
    %v65 = vmul.f32 %v63, %v63
    %v66 = vld [vmem:[#allocation7] sm:$0xff]
    %v67 = vld [vmem:[#allocation7 + $0x8] sm:$0xff]
    %v68 = vadd.f32 %v64, 0.0
    %v69 = vadd.f32 %v65, 0.0
    %v70 = vadd.f32 %v66, %v68
    %v71 = vadd.f32 %v67, %v69
    %72 = vst [vmem:[#allocation7] sm:$0xff] %v70
    %73 = vst [vmem:[#allocation7 + $0x8] sm:$0xff] %v71
    // Predicated region
    $region22: #{tpu_custom_call.1} parent=1 // pred_check
      _
    $region23: #{tpu_custom_call.1} parent=1 // pred_check_branch
      %75 = sbr.rel (0) target = $region25
    $region24: #{tpu_custom_call.1} parent=1 // pred_region
      %s77 = ssub.s32 256, 256
      %78 = vsyncadd [#allocation4], %s77
      %s79 = sshll.u32 [#allocation7], 4
      %s80 = int_to_ptr.vmem [resolvable:$true] %s79
      %85 = dma.vmem_to_hbm [thread:$0]  %s80, 256, %s2, [#allocation4], 128, 128, 8
    $region25: #{tpu_custom_call.1} parent=1 // pred_fallthru
      _
    // Predicated region
    $region26: #{tpu_custom_call.1} parent=1 // pred_check
      _
    $region27: #{tpu_custom_call.1} parent=1 // pred_check_branch
      %87 = sbr.rel (0) target = $region29
    $region28: #{tpu_custom_call.1} parent=1 // pred_region
      %88 = dma.done [#allocation4], 256
    $region29: #{tpu_custom_call.1} parent=1 // pred_fallthru
      _
    %89 = vsyncpa [#allocation3], 1
    %90 = vsyncpa [#allocation6], 1
    %91 = vsyncpa [#allocation4], 1

</llo_original>
